<compile_context>
chip_gen: v7x
topology: tpu7x:2x2x1
jax: 0.10.0
libtpu: 0.0.40
codegen_flags: <defaults>
</compile_context>

<pallas_src>
import jax
import jax.numpy as jnp
from jax.experimental import pallas as pl
from jax.experimental.pallas import tpu as pltpu


def _round_up(x, m):
    return ((x + m - 1) // m) * m


def _mlp_forward_kernel(x_ref, w1_ref, b1_ref, w2_ref, b2_ref, o_ref):
    # Layer 1: bf16 MXU matmul, f32 accumulation, f32 sigmoid.
    h = jnp.dot(x_ref[...], w1_ref[...], preferred_element_type=jnp.float32)
    h = jax.nn.sigmoid(h + b1_ref[...])
    # Layer 2: cast activations to bf16 for the MXU, accumulate in f32.
    o = jnp.dot(h.astype(jnp.bfloat16), w2_ref[...],
                preferred_element_type=jnp.float32)
    o = jax.nn.sigmoid(o + b2_ref[...])
    # Lane-dense store: (O, TILE_B) so the lane axis is the 128-multiple batch
    # tile (transpose goes to the otherwise-idle XLU slot).
    o_ref[...] = o.T.astype(o_ref.dtype)


def td_mlp_forward(x, w1, b1, w2, b2, *, tile_b=512):
    """Fused 2-layer sigmoid MLP forward over a batch of board observations."""
    batch, in_features = x.shape
    hidden = w1.shape[1]
    out_features = w2.shape[1]

    # Pad contraction / lane dims to full 128-lane vregs.
    f_pad = _round_up(in_features, 128)
    h_pad = _round_up(hidden, 128)
    # Batch tile: multiple of 128 (lane-dense output), clamped to padded batch.
    tile_b = max(128, _round_up(min(tile_b, _round_up(batch, 128)), 128))
    b_pad = _round_up(batch, tile_b)

    # Zero-pad operands; cast matmul operands to bf16 (halves x HBM traffic).
    xp = jnp.zeros((b_pad, f_pad), jnp.bfloat16)
    xp = xp.at[:batch, :in_features].set(x.astype(jnp.bfloat16))
    w1p = jnp.zeros((f_pad, h_pad), jnp.bfloat16)
    w1p = w1p.at[:in_features, :hidden].set(w1.astype(jnp.bfloat16))
    b1p = jnp.zeros((1, h_pad), jnp.float32)
    b1p = b1p.at[:, :hidden].set(b1.astype(jnp.float32))
    w2p = jnp.zeros((h_pad, out_features), jnp.bfloat16)
    w2p = w2p.at[:hidden, :].set(w2.astype(jnp.bfloat16))
    b2p = b2.astype(jnp.float32).reshape(1, out_features)

    grid = (b_pad // tile_b,)

    cost = pl.CostEstimate(
        flops=2 * b_pad * (f_pad * h_pad + h_pad * out_features),
        transcendentals=b_pad * (h_pad + out_features),
        bytes_accessed=(xp.size * 2 + w1p.size * 2 + w2p.size * 2
                        + b1p.size * 4 + b2p.size * 4
                        + b_pad * out_features * 4),
    )

    out_t = pl.pallas_call(
        _mlp_forward_kernel,
        out_shape=jax.ShapeDtypeStruct((out_features, b_pad), jnp.float32),
        grid=grid,
        in_specs=[
            pl.BlockSpec((tile_b, f_pad), lambda i: (i, 0)),        # x: batch-tiled
            pl.BlockSpec((f_pad, h_pad), lambda i: (0, 0)),         # W1: resident
            pl.BlockSpec((1, h_pad), lambda i: (0, 0)),             # b1: resident
            pl.BlockSpec((h_pad, out_features), lambda i: (0, 0)),  # W2: resident
            pl.BlockSpec((1, out_features), lambda i: (0, 0)),      # b2: resident
        ],
        out_specs=pl.BlockSpec((out_features, tile_b), lambda i: (0, i)),
        compiler_params=pltpu.CompilerParams(
            dimension_semantics=("parallel",)),
        cost_estimate=cost,
    )(xp, w1p, b1p, w2p, b2p)

    # Back to (batch, out_features); drop batch padding.
    return out_t.T[:batch]


def init_params(key, in_features, hidden_units, out_features):
    """Deterministic parameter init (uniform, like torch.nn.Linear default)."""
    k1, k2, k3, k4 = jax.random.split(key, 4)
    bound1 = 1.0 / jnp.sqrt(in_features)
    bound2 = 1.0 / jnp.sqrt(hidden_units)
    w1 = jax.random.uniform(k1, (in_features, hidden_units), jnp.float32,
                            -bound1, bound1)
    b1 = jax.random.uniform(k2, (1, hidden_units), jnp.float32, -bound1, bound1)
    w2 = jax.random.uniform(k3, (hidden_units, out_features), jnp.float32,
                            -bound2, bound2)
    b2 = jax.random.uniform(k4, (1, out_features), jnp.float32, -bound2, bound2)
    return w1, b1, w2, b2


if __name__ == "__main__":
    # TD-Gammon sized net: 198 input features -> 40 hidden -> 1 win probability.
    # batch of 300 board positions, tile_b=128 -> 3 batch tiles (exercises the
    # grid + non-divisible-batch padding path).
    batch = 300
    in_features = 198
    hidden_units = 40
    out_features = 1

    key = jax.random.PRNGKey(0)
    kx, kp = jax.random.split(key)
    x = jax.random.normal(kx, (batch, in_features), dtype=jnp.float32)
    w1, b1, w2, b2 = init_params(kp, in_features, hidden_units, out_features)

    out = td_mlp_forward(x, w1, b1, w2, b2, tile_b=128)
    out = jax.block_until_ready(out)

    # Pure-JAX f32 reference (kernel uses bf16 MXU operands -> loose tolerance).
    ref = jax.nn.sigmoid(jax.nn.sigmoid(x @ w1 + b1) @ w2 + b2)
    assert out.shape == (batch, out_features)
    assert jnp.allclose(out, ref, atol=3e-2, rtol=3e-2), (
        float(jnp.max(jnp.abs(out - ref))))

    # TODO(synk): update_weights / eligibility-trace TD(lambda) updates,
    # checkpointing, and the self-play training loop are host-side control flow
    # with no Pallas hot path; not translated.
    print("KERNEL_OK")
</pallas_src>

<mosaic_0001>
module attributes {stable_mosaic.version = 11 : i64} {
  func.func @_mlp_forward_kernel(%arg0: i32, %arg1: memref<128x256xbf16, #tpu.memory_space<vmem>>, %arg2: memref<256x128xbf16, #tpu.memory_space<vmem>>, %arg3: memref<1x128xf32, #tpu.memory_space<vmem>>, %arg4: memref<128x1xbf16, #tpu.memory_space<vmem>>, %arg5: memref<1x1xf32, #tpu.memory_space<vmem>>, %arg6: memref<1x128xf32, #tpu.memory_space<vmem>>) attributes {dimension_semantics = [#tpu.dimension_semantics<parallel>], iteration_bounds = array<i64: 3>, scalar_prefetch = 0 : i64, scratch_operands = 0 : i64, tpu.core_type = #tpu.core_type<tc>, window_params = [{transform_indices = @transform_0, window_bounds = array<i64: 128, 256>}, {pipeline_mode = #tpu.pipeline_mode<synchronous>, transform_indices = @transform_1, window_bounds = array<i64: 256, 128>}, {pipeline_mode = #tpu.pipeline_mode<synchronous>, transform_indices = @transform_2, window_bounds = array<i64: 1, 128>}, {pipeline_mode = #tpu.pipeline_mode<synchronous>, transform_indices = @transform_3, window_bounds = array<i64: 128, 1>}, {pipeline_mode = #tpu.pipeline_mode<synchronous>, transform_indices = @transform_4, window_bounds = array<i64: 1, 1>}, {transform_indices = @transform_5, window_bounds = array<i64: 1, 128>}]} {
    %c0 = arith.constant 0 : index
    %c0_0 = arith.constant 0 : index
    %0 = vector.load %arg1[%c0, %c0_0] : memref<128x256xbf16, #tpu.memory_space<vmem>>, vector<128x256xbf16>
    %c0_1 = arith.constant 0 : index
    %c0_2 = arith.constant 0 : index
    %1 = vector.load %arg2[%c0_1, %c0_2] : memref<256x128xbf16, #tpu.memory_space<vmem>>, vector<256x128xbf16>
    %cst = arith.constant dense<0.000000e+00> : vector<128x128xf32>
    %2 = tpu.matmul %0, %1, %cst {dimension_numbers = #tpu.dot_dimension_numbers<[1], [0], [0], [1], [0, 0, 1, 1], [], []>} : vector<128x256xbf16>, vector<256x128xbf16>, vector<128x128xf32> -> vector<128x128xf32>
    %c0_3 = arith.constant 0 : index
    %c0_4 = arith.constant 0 : index
    %3 = vector.load %arg3[%c0_3, %c0_4] : memref<1x128xf32, #tpu.memory_space<vmem>>, vector<1x128xf32>
    %4 = vector.broadcast %3 : vector<1x128xf32> to vector<128x128xf32>
    %5 = arith.addf %2, %4 : vector<128x128xf32>
    %6 = arith.negf %5 : vector<128x128xf32>
    %7 = math.exp %6 : vector<128x128xf32>
    %cst_5 = arith.constant 1.000000e+00 : f32
    %8 = vector.broadcast %cst_5 : f32 to vector<128x128xf32>
    %9 = arith.addf %8, %7 : vector<128x128xf32>
    %10 = arith.divf %8, %9 : vector<128x128xf32>
    %11 = arith.truncf %10 : vector<128x128xf32> to vector<128x128xbf16>
    %c0_6 = arith.constant 0 : index
    %c0_7 = arith.constant 0 : index
    %12 = vector.load %arg4[%c0_6, %c0_7] : memref<128x1xbf16, #tpu.memory_space<vmem>>, vector<128x1xbf16>
    %cst_8 = arith.constant dense<0.000000e+00> : vector<128x1xf32>
    %13 = tpu.matmul %11, %12, %cst_8 {dimension_numbers = #tpu.dot_dimension_numbers<[1], [0], [0], [1], [0, 0, 1, 1], [], []>} : vector<128x128xbf16>, vector<128x1xbf16>, vector<128x1xf32> -> vector<128x1xf32>
    %c0_9 = arith.constant 0 : index
    %c0_10 = arith.constant 0 : index
    %14 = vector.load %arg5[%c0_9, %c0_10] : memref<1x1xf32, #tpu.memory_space<vmem>>, vector<1x1xf32>
    %15 = vector.broadcast %14 : vector<1x1xf32> to vector<128x1xf32>
    %16 = arith.addf %13, %15 : vector<128x1xf32>
    %17 = arith.negf %16 : vector<128x1xf32>
    %18 = math.exp %17 : vector<128x1xf32>
    %cst_11 = arith.constant 1.000000e+00 : f32
    %19 = vector.broadcast %cst_11 : f32 to vector<128x1xf32>
    %20 = arith.addf %19, %18 : vector<128x1xf32>
    %21 = arith.divf %19, %20 : vector<128x1xf32>
    %22 = tpu.transpose %21, [1, 0] : vector<128x1xf32> -> vector<1x128xf32>
    %c0_12 = arith.constant 0 : index
    %c0_13 = arith.constant 0 : index
    %23 = vector.load %arg6[%c0_12, %c0_13] : memref<1x128xf32, #tpu.memory_space<vmem>>, vector<1x128xf32>
    tpu.vector_store %arg6[%c0_12, %c0_13], %22 {strides = array<i32>} : memref<1x128xf32, #tpu.memory_space<vmem>>, vector<1x128xf32>,
    return
  }
  func.func @transform_0(%arg0: i32) -> (i32, i32) {
    %c0_i32 = arith.constant 0 : i32
    %c0_i32_0 = arith.constant 0 : i32
    return %arg0, %c0_i32 : i32, i32
  }
  func.func @transform_1(%arg0: i32) -> (i32, i32) {
    %c0_i32 = arith.constant 0 : i32
    %c0_i32_0 = arith.constant 0 : i32
    %c0_i32_1 = arith.constant 0 : i32
    return %c0_i32, %c0_i32_0 : i32, i32
  }
  func.func @transform_2(%arg0: i32) -> (i32, i32) {
    %c0_i32 = arith.constant 0 : i32
    %c0_i32_0 = arith.constant 0 : i32
    %c0_i32_1 = arith.constant 0 : i32
    return %c0_i32, %c0_i32_0 : i32, i32
  }
  func.func @transform_3(%arg0: i32) -> (i32, i32) {
    %c0_i32 = arith.constant 0 : i32
    %c0_i32_0 = arith.constant 0 : i32
    %c0_i32_1 = arith.constant 0 : i32
    return %c0_i32, %c0_i32_0 : i32, i32
  }
  func.func @transform_4(%arg0: i32) -> (i32, i32) {
    %c0_i32 = arith.constant 0 : i32
    %c0_i32_0 = arith.constant 0 : i32
    %c0_i32_1 = arith.constant 0 : i32
    return %c0_i32, %c0_i32_0 : i32, i32
  }
  func.func @transform_5(%arg0: i32) -> (i32, i32) {
    %c0_i32 = arith.constant 0 : i32
    %c0_i32_0 = arith.constant 0 : i32
    return %c0_i32, %arg0 : i32, i32
  }
}

</mosaic_0001>

<llo_original>
// kernel: tpu_custom_call.1
$region0: #{tpu_custom_call.1}
  #allocation0 [shape = 'u32[]', space=smem, size = 0x4, offset = 0x4, fixed_abs, tag = 'smem constant byte address 0x4 - core index']
  #allocation1 [shape = 'u32[144,128]{1,0:T(1,128)}', space=vmem, size = 0x12000, scoped, tag = 'internal scratch']
  #allocation2 [shape = 'f32[1,1]{1,0:T(1,128)S(1)}', space=vmem, size = 0x200, scoped, tag = 'scoped memory for tpu_custom_call.1']
  %s0 = inlined_call_operand.hbm [shape: bf16[384,256], index: 0, kind: input, shape index: {}]
  %s1 = inlined_call_operand.hbm [shape: bf16[256,128], index: 1, kind: input, shape index: {}]
  %s2 = inlined_call_operand.vmem [shape: f32[1,128], index: 2, kind: input, shape index: {}]
  %s3 = inlined_call_operand.vmem [shape: bf16[128,1], index: 3, kind: input, shape index: {}]
  %s4 = inlined_call_operand.<no memory space> [shape: f32[1,1], index: 4, kind: input, shape index: {}]
  %s5 = inlined_call_operand.hbm [shape: f32[1,384], index: 5, kind: output, shape index: {}]
  %s6 = sld [smem:[#allocation0]]
  $region61: #{tpu_custom_call.1} parent=0
    _
  %s8 = ssub.s32 1, %s6
  %s9 = scalar_select 0, %s8, %s6
  %v10 = vstv %s4
  %11 = vst [vmem:[#allocation2] sm:$0x1] %v10
  $region1: #{tpu_custom_call.1} parent=0
    #allocation3 [shape = 'u8[131072]{0}', space=vmem, size = 0x20000, scoped, tag = 'input window, operand 0']
    #allocation4 [shape = 's32[2]{0}', space=sflag, size = 0x8, scoped, tag = 'scoped memory for tpu_custom_call.1']
    #allocation5 [shape = 's32[2]{0}', space=sflag, size = 0x8, scoped, tag = 'scoped memory for tpu_custom_call.1']
    #allocation6 [shape = 'u8[65536]{0}', space=vmem, size = 0x10000, scoped, tag = 'input window, operand 1, single buffered']
    #allocation7 [shape = 's32[1]{0}', space=sflag, size = 0x4, scoped, tag = 'scoped memory for tpu_custom_call.1']
    #allocation8 [shape = 'u8[1024]{0}', space=vmem, size = 0x400, scoped, tag = 'output window, operand 0']
    %12 = vsyncpa [#allocation4], 0
    %s13 = scalar_lea.sflag [#allocation4], 1
    %14 = vsyncpa %s13, 0
    %15 = vsyncpa [#allocation7], 0
    %16 = vsyncpa [#allocation5], 0
    %s17 = scalar_lea.sflag [#allocation5], 1
    %18 = vsyncpa %s17, 0
    loop: start=0, step=1, limit=5
    $region2: #{tpu_custom_call.1} parent=1 // loop_pre_header
      _
    $region3: #{tpu_custom_call.1} parent=1 // loop_header
      %s20 = sphi 0, %s24
      %p21 = scmp.ge.s32.totalorder %s20, 5
      %s30 = sphi 0, %s32
      %s33 = sphi 0, %s30
      %s34 = sphi 0, %s33
      %s50 = sphi 0, %s34
      %s54 = sphi 0, %s54
      %s56 = sphi 0, %s54
      %s57 = sphi 0, %s56
      %s71 = sphi 0, %s57
      %s75 = sphi 0, %s75
      %s77 = sphi 0, %s75
      %s78 = sphi 0, %s77
      %s92 = sphi 0, %s78
      %s96 = sphi 0, %s96
      %s98 = sphi 0, %s96
      %s99 = sphi 0, %s98
      %s113 = sphi 0, %s99
      %s117 = sphi 0, %s117
      %s119 = sphi 0, %s117
      %s120 = sphi 0, %s119
      %s134 = sphi 0, %s120
      %s140 = sphi 0, %s142
      %s143 = sphi 0, %s140
      %s144 = sphi 0, %s143
      %s160 = sphi 0, %s144
    $region4: #{tpu_custom_call.1} parent=1 // loop_header_branch
      %23 = sbr.rel (%p21) target = $region8
    $region5: #{tpu_custom_call.1} parent=1 // loop_body
      %s25 = ssub.s32 %s20, 1
      %s26 = ssub.s32 %s20, 2
      %s27 = sadd.s32 %s20, 1
      %s28 = ssub.s32 %s20, %s27
      %p29 = scmp.eq.s32.totalorder %s28, 0
      %s31 = sadd.s32 %s30, 1
      %s32 = scalar_select %p29, %s30, %s31
      %p35 = pneg %p29
      %p36 = scmp.eq.s32.totalorder %s20, 2
      %p37 = por %p35, %p36
      %p38 = scmp.ne.s32.totalorder %s30, %s33
      %p39 = scmp.eq.s32.totalorder %s20, 0
      %p40 = por %p38, %p39
      %p41 = scmp.ne.s32.totalorder %s30, %s33
      %p42 = scmp.eq.s32.totalorder %s25, 2
      %p43 = por %p41, %p42
      %p44 = scmp.ne.s32.totalorder %s33, %s34
      %p45 = scmp.eq.s32.totalorder %s25, 0
      %p46 = por %p44, %p45
      %p47 = scmp.ne.s32.totalorder %s33, %s34
      %p48 = scmp.eq.s32.totalorder %s26, 2
      %p49 = por %p47, %p48
      %p51 = scmp.ne.s32.totalorder %s34, %s50
      %p52 = scmp.eq.s32.totalorder %s26, 0
      %p53 = por %p51, %p52
      %s55 = sadd.s32 %s54, 1
      %p58 = scmp.eq.s32.totalorder %s20, 2
      %p59 = scmp.ne.s32.totalorder %s54, %s56
      %p60 = scmp.eq.s32.totalorder %s20, 0
      %p61 = por %p59, %p60
      %p62 = scmp.ne.s32.totalorder %s54, %s56
      %p63 = scmp.eq.s32.totalorder %s25, 2
      %p64 = por %p62, %p63
      %p65 = scmp.ne.s32.totalorder %s56, %s57
      %p66 = scmp.eq.s32.totalorder %s25, 0
      %p67 = por %p65, %p66
      %p68 = scmp.ne.s32.totalorder %s56, %s57
      %p69 = scmp.eq.s32.totalorder %s26, 2
      %p70 = por %p68, %p69
      %p72 = scmp.ne.s32.totalorder %s57, %s71
      %p73 = scmp.eq.s32.totalorder %s26, 0
      %p74 = por %p72, %p73
      %s76 = sadd.s32 %s75, 1
      %p79 = scmp.eq.s32.totalorder %s20, 2
      %p80 = scmp.ne.s32.totalorder %s75, %s77
      %p81 = scmp.eq.s32.totalorder %s20, 0
      %p82 = por %p80, %p81
      %p83 = scmp.ne.s32.totalorder %s75, %s77
      %p84 = scmp.eq.s32.totalorder %s25, 2
      %p85 = por %p83, %p84
      %p86 = scmp.ne.s32.totalorder %s77, %s78
      %p87 = scmp.eq.s32.totalorder %s25, 0
      %p88 = por %p86, %p87
      %p89 = scmp.ne.s32.totalorder %s77, %s78
      %p90 = scmp.eq.s32.totalorder %s26, 2
      %p91 = por %p89, %p90
      %p93 = scmp.ne.s32.totalorder %s78, %s92
      %p94 = scmp.eq.s32.totalorder %s26, 0
      %p95 = por %p93, %p94
      %s97 = sadd.s32 %s96, 1
      %p100 = scmp.eq.s32.totalorder %s20, 2
      %p101 = scmp.ne.s32.totalorder %s96, %s98
      %p102 = scmp.eq.s32.totalorder %s20, 0
      %p103 = por %p101, %p102
      %p104 = scmp.ne.s32.totalorder %s96, %s98
      %p105 = scmp.eq.s32.totalorder %s25, 2
      %p106 = por %p104, %p105
      %p107 = scmp.ne.s32.totalorder %s98, %s99
      %p108 = scmp.eq.s32.totalorder %s25, 0
      %p109 = por %p107, %p108
      %p110 = scmp.ne.s32.totalorder %s98, %s99
      %p111 = scmp.eq.s32.totalorder %s26, 2
      %p112 = por %p110, %p111
      %p114 = scmp.ne.s32.totalorder %s99, %s113
      %p115 = scmp.eq.s32.totalorder %s26, 0
      %p116 = por %p114, %p115
      %s118 = sadd.s32 %s117, 1
      %p121 = scmp.eq.s32.totalorder %s20, 2
      %p122 = scmp.ne.s32.totalorder %s117, %s119
      %p123 = scmp.eq.s32.totalorder %s20, 0
      %p124 = por %p122, %p123
      %p125 = scmp.ne.s32.totalorder %s117, %s119
      %p126 = scmp.eq.s32.totalorder %s25, 2
      %p127 = por %p125, %p126
      %p128 = scmp.ne.s32.totalorder %s119, %s120
      %p129 = scmp.eq.s32.totalorder %s25, 0
      %p130 = por %p128, %p129
      %p131 = scmp.ne.s32.totalorder %s119, %s120
      %p132 = scmp.eq.s32.totalorder %s26, 2
      %p133 = por %p131, %p132
      %p135 = scmp.ne.s32.totalorder %s120, %s134
      %p136 = scmp.eq.s32.totalorder %s26, 0
      %p137 = por %p135, %p136
      %s138 = ssub.s32 %s20, %s27
      %p139 = scmp.eq.s32.totalorder %s138, 0
      %s141 = sadd.s32 %s140, 1
      %s142 = scalar_select %p139, %s140, %s141
      %p145 = pneg %p139
      %p146 = scmp.eq.s32.totalorder %s20, 2
      %p147 = por %p145, %p146
      %p148 = scmp.ne.s32.totalorder %s140, %s143
      %p149 = scmp.eq.s32.totalorder %s20, 0
      %p150 = por %p148, %p149
      %p151 = scmp.ne.s32.totalorder %s140, %s143
      %p152 = scmp.eq.s32.totalorder %s25, 2
      %p153 = por %p151, %p152
      %p154 = scmp.ne.s32.totalorder %s143, %s144
      %p155 = scmp.eq.s32.totalorder %s25, 0
      %p156 = por %p154, %p155
      %p157 = scmp.ne.s32.totalorder %s143, %s144
      %p158 = scmp.eq.s32.totalorder %s26, 2
      %p159 = por %p157, %p158
      %p161 = scmp.ne.s32.totalorder %s144, %s160
      %p162 = scmp.eq.s32.totalorder %s26, 0
      %p163 = por %p161, %p162
      %p164 = scmp.le.s32.totalorder 1, %s20
      %p165 = scmp.lt.s32.totalorder %s20, 4
      %p166 = pnand %p164, %p165
      %p167 = pneg %p166
      // Predicated region
      $region9: #{tpu_custom_call.1} parent=5 // pred_check
        _
      $region10: #{tpu_custom_call.1} parent=5 // pred_check_branch
        %169 = sbr.rel (%p166) target = $region12
      $region11: #{tpu_custom_call.1} parent=5 // pred_region
        %s170 = ssub.s32 %s20, 1
        // Predicated region
        $region13: #{tpu_custom_call.1} parent=11 // pred_check
          %p171 = pneg %p67
        $region14: #{tpu_custom_call.1} parent=11 // pred_check_branch
          %173 = sbr.rel (%p171) target = $region16
        $region15: #{tpu_custom_call.1} parent=11 // pred_region
          %s175 = ssub.s32 2048, 2048
          %176 = vsyncadd [#allocation7], %s175
          %s177 = sshll.u32 [#allocation6], 4
          %s178 = int_to_ptr.vmem [resolvable:$true] %s177
          %183 = dma.hbm_to_vmem [thread:$0]  %s1, 2048, %s178, [#allocation7], 64, 64, 4
        $region16: #{tpu_custom_call.1} parent=11 // pred_fallthru
          _
        // Predicated region
        $region17: #{tpu_custom_call.1} parent=11 // pred_check
          %p184 = pneg %p88
        $region18: #{tpu_custom_call.1} parent=11 // pred_check_branch
          %186 = sbr.rel (%p184) target = $region20
        $region19: #{tpu_custom_call.1} parent=11 // pred_region
          _
        $region20: #{tpu_custom_call.1} parent=11 // pred_fallthru
          _
        // Predicated region
        $region21: #{tpu_custom_call.1} parent=11 // pred_check
          %p187 = pneg %p109
        $region22: #{tpu_custom_call.1} parent=11 // pred_check_branch
          %189 = sbr.rel (%p187) target = $region24
        $region23: #{tpu_custom_call.1} parent=11 // pred_region
          _
        $region24: #{tpu_custom_call.1} parent=11 // pred_fallthru
          _
        // Predicated region
        $region25: #{tpu_custom_call.1} parent=11 // pred_check
          %p190 = pneg %p130
        $region26: #{tpu_custom_call.1} parent=11 // pred_check_branch
          %192 = sbr.rel (%p190) target = $region28
        $region27: #{tpu_custom_call.1} parent=11 // pred_region
          _
        $region28: #{tpu_custom_call.1} parent=11 // pred_fallthru
          _
      $region12: #{tpu_custom_call.1} parent=5 // pred_fallthru
        _
      %p193 = scmp.lt.s32.totalorder %s20, 3
      // Predicated region
      $region29: #{tpu_custom_call.1} parent=5 // pred_check
        %p194 = pneg %p193
      $region30: #{tpu_custom_call.1} parent=5 // pred_check_branch
        %196 = sbr.rel (%p194) target = $region32
      $region31: #{tpu_custom_call.1} parent=5 // pred_region
        // Predicated region
        $region33: #{tpu_custom_call.1} parent=31 // pred_check
          %p197 = pneg %p40
        $region34: #{tpu_custom_call.1} parent=31 // pred_check_branch
          %199 = sbr.rel (%p197) target = $region36
        $region35: #{tpu_custom_call.1} parent=31 // pred_region
          %s200 = sand.u32 %s30, 1
          %s201 = scalar_lea.sflag [#allocation4], %s200
          %s202 = sand.u32 %s30, 1
          %s203 = smul.addr %s202, 128
          %s204 = scalar_lea.vmem [#allocation3], %s203
          %s205 = smul.u32 16, %s20
          %s207 = ssub.s32 2048, 2048
          %208 = vsyncadd %s201, %s207
          %s209 = smul.addr %s205, 2
          %s210 = smul.addr %s209, 64
          %s211 = scalar_lea.hbm %s0, %s210
          %s212 = sshll.u32 %s204, 4
          %s213 = int_to_ptr.vmem [resolvable:$true] %s212
          %218 = dma.hbm_to_vmem [thread:$0]  %s211, 2048, %s213, %s201, 128, 128, 8
        $region36: #{tpu_custom_call.1} parent=31 // pred_fallthru
          _
      $region32: #{tpu_custom_call.1} parent=5 // pred_fallthru
        _
      %p219 = scmp.le.s32.totalorder 1, %s20
      %p220 = scmp.lt.s32.totalorder %s20, 4
      %p221 = pnand %p219, %p220
      %p222 = pneg %p221
      // Predicated region
      $region37: #{tpu_custom_call.1} parent=5 // pred_check
        _
      $region38: #{tpu_custom_call.1} parent=5 // pred_check_branch
        %224 = sbr.rel (%p221) target = $region40
      $region39: #{tpu_custom_call.1} parent=5 // pred_region
        %s225 = ssub.s32 %s20, 1
        %s226 = sand.u32 %s33, 1
        %s227 = scalar_lea.sflag [#allocation4], %s226
        %s228 = sand.u32 %s33, 1
        %s229 = smul.addr %s228, 128
        %s230 = scalar_lea.vmem [#allocation3], %s229
        // Predicated region
        $region41: #{tpu_custom_call.1} parent=39 // pred_check
          %p231 = pneg %p46
        $region42: #{tpu_custom_call.1} parent=39 // pred_check_branch
          %233 = sbr.rel (%p231) target = $region44
        $region43: #{tpu_custom_call.1} parent=39 // pred_region
          %234 = dma.done %s227, 2048
        $region44: #{tpu_custom_call.1} parent=39 // pred_fallthru
          _
        // Predicated region
        $region45: #{tpu_custom_call.1} parent=39 // pred_check
          %p235 = pneg %p67
        $region46: #{tpu_custom_call.1} parent=39 // pred_check_branch
          %237 = sbr.rel (%p235) target = $region48
        $region47: #{tpu_custom_call.1} parent=39 // pred_region
          %238 = dma.done [#allocation7], 2048
        $region48: #{tpu_custom_call.1} parent=39 // pred_fallthru
          _
        %s239 = sand.u32 %s33, 1
        %s240 = scalar_lea.sflag [#allocation4], %s239
        %s241 = sand.u32 %s33, 1
        %s242 = smul.addr %s241, 128
        %s243 = scalar_lea.vmem [#allocation3], %s242
        %p244 = pneg %p46
        %p245 = pneg %p43
        %p246 = pneg %p67
        %p247 = pneg %p64
        %p248 = pneg %p88
        %p249 = pneg %p85
        %p250 = pneg %p109
        %p251 = pneg %p106
        %p252 = pneg %p130
        %p253 = pneg %p127
        %p254 = pneg %p156
        %p255 = pneg %p153
        %s256 = sand.u32 %s143, 1
        %s257 = scalar_lea.sflag [#allocation5], %s256
        %s258 = sand.u32 %s143, 1
        %s259 = scalar_lea.vmem [#allocation8], %s258
        %s260 = smul.u32 16, %s25
        %v262 = vld [vmem:[%s230] sm:$0xff]
        %v263 = vld [vmem:[%s230 + $0x8] sm:$0xff]
        %v264 = vld [vmem:[%s230 + $0x10] sm:$0xff]
        %v265 = vld [vmem:[%s230 + $0x18] sm:$0xff]
        %v266 = vld [vmem:[%s230 + $0x20] sm:$0xff]
        %v267 = vld [vmem:[%s230 + $0x28] sm:$0xff]
        %v268 = vld [vmem:[%s230 + $0x30] sm:$0xff]
        %v269 = vld [vmem:[%s230 + $0x38] sm:$0xff]
        %v270 = vld [vmem:[%s230 + $0x40] sm:$0xff]
        %v271 = vld [vmem:[%s230 + $0x48] sm:$0xff]
        %v272 = vld [vmem:[%s230 + $0x50] sm:$0xff]
        %v273 = vld [vmem:[%s230 + $0x58] sm:$0xff]
        %v274 = vld [vmem:[%s230 + $0x60] sm:$0xff]
        %v275 = vld [vmem:[%s230 + $0x68] sm:$0xff]
        %v276 = vld [vmem:[%s230 + $0x70] sm:$0xff]
        %v277 = vld [vmem:[%s230 + $0x78] sm:$0xff]
        %v278 = vld [vmem:[#allocation6] sm:$0xf]
        %v279 = vld [vmem:[#allocation6 + $0x4] sm:$0xf]
        %v280 = vld [vmem:[#allocation6 + $0x8] sm:$0xf]
        %v281 = vld [vmem:[#allocation6 + $0xc] sm:$0xf]
        %v282 = vld [vmem:[#allocation6 + $0x10] sm:$0xf]
        %v283 = vld [vmem:[#allocation6 + $0x14] sm:$0xf]
        %v284 = vld [vmem:[#allocation6 + $0x18] sm:$0xf]
        %v285 = vld [vmem:[#allocation6 + $0x1c] sm:$0xf]
        %v286 = vld [vmem:[#allocation6 + $0x20] sm:$0xf]
        %v287 = vld [vmem:[#allocation6 + $0x24] sm:$0xf]
        %v288 = vld [vmem:[#allocation6 + $0x28] sm:$0xf]
        %v289 = vld [vmem:[#allocation6 + $0x2c] sm:$0xf]
        %v290 = vld [vmem:[#allocation6 + $0x30] sm:$0xf]
        %v291 = vld [vmem:[#allocation6 + $0x34] sm:$0xf]
        %v292 = vld [vmem:[#allocation6 + $0x38] sm:$0xf]
        %v293 = vld [vmem:[#allocation6 + $0x3c] sm:$0xf]
        %v294 = vld [vmem:[#allocation6 + $0x40] sm:$0xf]
        %v295 = vld [vmem:[#allocation6 + $0x44] sm:$0xf]
        %v296 = vld [vmem:[#allocation6 + $0x48] sm:$0xf]
        %v297 = vld [vmem:[#allocation6 + $0x4c] sm:$0xf]
        %v298 = vld [vmem:[#allocation6 + $0x50] sm:$0xf]
        %v299 = vld [vmem:[#allocation6 + $0x54] sm:$0xf]
        %v300 = vld [vmem:[#allocation6 + $0x58] sm:$0xf]
        %v301 = vld [vmem:[#allocation6 + $0x5c] sm:$0xf]
        %v302 = vld [vmem:[#allocation6 + $0x60] sm:$0xf]
        %v303 = vld [vmem:[#allocation6 + $0x64] sm:$0xf]
        %v304 = vld [vmem:[#allocation6 + $0x68] sm:$0xf]
        %v305 = vld [vmem:[#allocation6 + $0x6c] sm:$0xf]
        %v306 = vld [vmem:[#allocation6 + $0x70] sm:$0xf]
        %v307 = vld [vmem:[#allocation6 + $0x74] sm:$0xf]
        %v308 = vld [vmem:[#allocation6 + $0x78] sm:$0xf]
        %v309 = vld [vmem:[#allocation6 + $0x7c] sm:$0xf]
        %v310 = vld [vmem:[%s2] sm:$0x1]
        %v312 = vlaneseq
        %v313 = vshrl.u32 %v312, 7
        %v314 = vsub.s32 0, %v313
        %v315 = vrot.slane %v310, %v314
        %v333 = vunpack.c.l.b16 %v262
        %v334 = vunpack.c.h.b16 %v262
        %v335 = vunpack.c.l.b16 %v263
        %v336 = vunpack.c.h.b16 %v263
        %v337 = vunpack.c.l.b16 %v264
        %v338 = vunpack.c.h.b16 %v264
        %v339 = vunpack.c.l.b16 %v265
        %v340 = vunpack.c.h.b16 %v265
        %v341 = vunpack.c.l.b16 %v266
        %v342 = vunpack.c.h.b16 %v266
        %v343 = vunpack.c.l.b16 %v267
        %v344 = vunpack.c.h.b16 %v267
        %v345 = vunpack.c.l.b16 %v268
        %v346 = vunpack.c.h.b16 %v268
        %v347 = vunpack.c.l.b16 %v269
        %v348 = vunpack.c.h.b16 %v269
        %v349 = vunpack.c.l.b16 %v270
        %v350 = vunpack.c.h.b16 %v270
        %v351 = vunpack.c.l.b16 %v271
        %v352 = vunpack.c.h.b16 %v271
        %v353 = vunpack.c.l.b16 %v272
        %v354 = vunpack.c.h.b16 %v272
        %v355 = vunpack.c.l.b16 %v273
        %v356 = vunpack.c.h.b16 %v273
        %v357 = vunpack.c.l.b16 %v274
        %v358 = vunpack.c.h.b16 %v274
        %v359 = vunpack.c.l.b16 %v275
        %v360 = vunpack.c.h.b16 %v275
        %v361 = vunpack.c.l.b16 %v276
        %v362 = vunpack.c.h.b16 %v276
        %v363 = vunpack.c.l.b16 %v277
        %v364 = vunpack.c.h.b16 %v277
        %v365 = vpack.c.b16 %v335, %v333
        %v366 = vpack.c.b16 %v336, %v334
        %v367 = vpack.c.b16 %v339, %v337
        %v368 = vpack.c.b16 %v340, %v338
        %v369 = vpack.c.b16 %v343, %v341
        %v370 = vpack.c.b16 %v344, %v342
        %v371 = vpack.c.b16 %v347, %v345
        %v372 = vpack.c.b16 %v348, %v346
        %v373 = vpack.c.b16 %v351, %v349
        %v374 = vpack.c.b16 %v352, %v350
        %v375 = vpack.c.b16 %v355, %v353
        %v376 = vpack.c.b16 %v356, %v354
        %v377 = vpack.c.b16 %v359, %v357
        %v378 = vpack.c.b16 %v360, %v358
        %v379 = vpack.c.b16 %v363, %v361
        %v380 = vpack.c.b16 %v364, %v362
        %v429 = vunpack.c.l.b16 %v278
        %v430 = vunpack.c.l.b16 %v279
        %v431 = vunpack.c.l.b16 %v280
        %v432 = vunpack.c.l.b16 %v281
        %v433 = vunpack.c.l.b16 %v282
        %v434 = vunpack.c.l.b16 %v283
        %v435 = vunpack.c.l.b16 %v284
        %v436 = vunpack.c.l.b16 %v285
        %v437 = vunpack.c.l.b16 %v286
        %v438 = vunpack.c.l.b16 %v287
        %v439 = vunpack.c.l.b16 %v288
        %v440 = vunpack.c.l.b16 %v289
        %v441 = vunpack.c.l.b16 %v290
        %v442 = vunpack.c.l.b16 %v291
        %v443 = vunpack.c.l.b16 %v292
        %v444 = vunpack.c.l.b16 %v293
        %v445 = vunpack.c.l.b16 %v294
        %v446 = vunpack.c.l.b16 %v295
        %v447 = vunpack.c.l.b16 %v296
        %v448 = vunpack.c.l.b16 %v297
        %v449 = vunpack.c.l.b16 %v298
        %v450 = vunpack.c.l.b16 %v299
        %v451 = vunpack.c.l.b16 %v300
        %v452 = vunpack.c.l.b16 %v301
        %v453 = vunpack.c.l.b16 %v302
        %v454 = vunpack.c.l.b16 %v303
        %v455 = vunpack.c.l.b16 %v304
        %v456 = vunpack.c.l.b16 %v305
        %v457 = vunpack.c.l.b16 %v306
        %v458 = vunpack.c.l.b16 %v307
        %v459 = vunpack.c.l.b16 %v308
        %v460 = vunpack.c.l.b16 %v309
        %v461 = vpack.c.b16 %v430, %v429
        %v462 = vpack.c.b16 %v432, %v431
        %v463 = vpack.c.b16 %v434, %v433
        %v464 = vpack.c.b16 %v436, %v435
        %v465 = vpack.c.b16 %v438, %v437
        %v466 = vpack.c.b16 %v440, %v439
        %v467 = vpack.c.b16 %v442, %v441
        %v468 = vpack.c.b16 %v444, %v443
        %v469 = vpack.c.b16 %v446, %v445
        %v470 = vpack.c.b16 %v448, %v447
        %v471 = vpack.c.b16 %v450, %v449
        %v472 = vpack.c.b16 %v452, %v451
        %v473 = vpack.c.b16 %v454, %v453
        %v474 = vpack.c.b16 %v456, %v455
        %v475 = vpack.c.b16 %v458, %v457
        %v476 = vpack.c.b16 %v460, %v459
        %493 = vmatprep.subr.bf16.mxu0 0
        %494 = vmatpush1.bf16.msra.mxu0 %v461
        %495 = vmatprep.subr.bf16.mxu0 0
        %496 = vmatpush1.bf16.msra.mxu0 %v462
        %497 = vmatprep.subr.bf16.mxu0 0
        %498 = vmatpush1.bf16.msra.mxu0 %v463
        %499 = vmatprep.subr.bf16.mxu0 0
        %500 = vmatpush1.bf16.msra.mxu0 %v464
        %501 = vmatprep.subr.bf16.mxu0 0
        %502 = vmatpush1.bf16.msra.mxu0 %v465
        %503 = vmatprep.subr.bf16.mxu0 0
        %504 = vmatpush1.bf16.msra.mxu0 %v466
        %505 = vmatprep.subr.bf16.mxu0 0
        %506 = vmatpush1.bf16.msra.mxu0 %v467
        %507 = vmatprep.subr.bf16.mxu0 0
        %508 = vmatpush1.bf16.msra.mxu0 %v468
        %509 = vmatprep.subr.bf16.mxu0 0
        %510 = vmatpush1.bf16.msra.mxu0 %v469
        %511 = vmatprep.subr.bf16.mxu0 0
        %512 = vmatpush1.bf16.msra.mxu0 %v470
        %513 = vmatprep.subr.bf16.mxu0 0
        %514 = vmatpush1.bf16.msra.mxu0 %v471
        %515 = vmatprep.subr.bf16.mxu0 0
        %516 = vmatpush1.bf16.msra.mxu0 %v472
        %517 = vmatprep.subr.bf16.mxu0 0
        %518 = vmatpush1.bf16.msra.mxu0 %v473
        %519 = vmatprep.subr.bf16.mxu0 0
        %520 = vmatpush1.bf16.msra.mxu0 %v474
        %521 = vmatprep.subr.bf16.mxu0 0
        %522 = vmatpush1.bf16.msra.mxu0 %v475
        %523 = vmatprep.subr.bf16.mxu0 0
        %524 = vmatpush1.bf16.msra.mxu0 %v476
        %525 = vmatprep.mubr.bf16.mxu0 %v366
        %526 = vmatmul.mubr.bf16.gmra.mrb[0].mxu0 %v365
        %v527 = vpop.f32.mrb[0].mxu0
        %v528 = vadd.f32 %v315, %v527
        %v529 = vpop.f32.mrb[0].mxu0
        %v530 = vpop.f32.mrb[0].mxu0
        %v531 = vadd.f32 %v315, %v530
        %v532 = vpop.f32.mrb[0].mxu0
        %533 = vmatprep.mubr.bf16.mxu0 %v368
        %534 = vmatmul.mubr.bf16.gmra.mrb[0].mxu0 %v367
        %v535 = vpop.f32.mrb[0].mxu0
        %v536 = vadd.f32 %v315, %v535
        %v537 = vpop.f32.mrb[0].mxu0
        %v538 = vpop.f32.mrb[0].mxu0
        %v539 = vadd.f32 %v315, %v538
        %v540 = vpop.f32.mrb[0].mxu0
        %541 = vmatprep.mubr.bf16.mxu0 %v370
        %542 = vmatmul.mubr.bf16.gmra.mrb[0].mxu0 %v369
        %v543 = vpop.f32.mrb[0].mxu0
        %v544 = vadd.f32 %v315, %v543
        %v545 = vpop.f32.mrb[0].mxu0
        %v546 = vpop.f32.mrb[0].mxu0
        %v547 = vadd.f32 %v315, %v546
        %v548 = vpop.f32.mrb[0].mxu0
        %549 = vmatprep.mubr.bf16.mxu0 %v372
        %550 = vmatmul.mubr.bf16.gmra.mrb[0].mxu0 %v371
        %v551 = vpop.f32.mrb[0].mxu0
        %v552 = vadd.f32 %v315, %v551
        %v553 = vpop.f32.mrb[0].mxu0
        %v554 = vpop.f32.mrb[0].mxu0
        %v555 = vadd.f32 %v315, %v554
        %v556 = vpop.f32.mrb[0].mxu0
        %557 = vmatprep.mubr.bf16.mxu0 %v374
        %558 = vmatmul.mubr.bf16.gmra.mrb[0].mxu0 %v373
        %v559 = vpop.f32.mrb[0].mxu0
        %v560 = vadd.f32 %v315, %v559
        %v561 = vpop.f32.mrb[0].mxu0
        %v562 = vpop.f32.mrb[0].mxu0
        %v563 = vadd.f32 %v315, %v562
        %v564 = vpop.f32.mrb[0].mxu0
        %565 = vmatprep.mubr.bf16.mxu0 %v376
        %566 = vmatmul.mubr.bf16.gmra.mrb[0].mxu0 %v375
        %v567 = vpop.f32.mrb[0].mxu0
        %v568 = vadd.f32 %v315, %v567
        %v569 = vpop.f32.mrb[0].mxu0
        %v570 = vpop.f32.mrb[0].mxu0
        %v571 = vadd.f32 %v315, %v570
        %v572 = vpop.f32.mrb[0].mxu0
        %573 = vmatprep.mubr.bf16.mxu0 %v378
        %574 = vmatmul.mubr.bf16.gmra.mrb[0].mxu0 %v377
        %v575 = vpop.f32.mrb[0].mxu0
        %v576 = vadd.f32 %v315, %v575
        %v577 = vpop.f32.mrb[0].mxu0
        %v578 = vpop.f32.mrb[0].mxu0
        %v579 = vadd.f32 %v315, %v578
        %v580 = vpop.f32.mrb[0].mxu0
        %581 = vmatprep.mubr.bf16.mxu0 %v380
        %582 = vmatmul.mubr.bf16.gmra.mrb[0].mxu0 %v379
        %v583 = vpop.f32.mrb[0].mxu0
        %v584 = vadd.f32 %v315, %v583
        %v585 = vpop.f32.mrb[0].mxu0
        %v586 = vpop.f32.mrb[0].mxu0
        %v587 = vadd.f32 %v315, %v586
        %v588 = vpop.f32.mrb[0].mxu0
        %589 = vdwg.mxu0
        %v590 = vxor.u32 %v528, 2147483648
        %v591 = vxor.u32 %v531, 2147483648
        %v592 = vxor.u32 %v536, 2147483648
        %v593 = vxor.u32 %v539, 2147483648
        %v594 = vxor.u32 %v544, 2147483648
        %v595 = vxor.u32 %v547, 2147483648
        %v596 = vxor.u32 %v552, 2147483648
        %v597 = vxor.u32 %v555, 2147483648
        %v598 = vxor.u32 %v560, 2147483648
        %v599 = vxor.u32 %v563, 2147483648
        %v600 = vxor.u32 %v568, 2147483648
        %v601 = vxor.u32 %v571, 2147483648
        %v602 = vxor.u32 %v576, 2147483648
        %v603 = vxor.u32 %v579, 2147483648
        %v604 = vxor.u32 %v584, 2147483648
        %v605 = vxor.u32 %v587, 2147483648
        %v606 = vmul.f32 %v590, 1.442695
        %v607 = vpow.pop %v606
        %v608 = vmul.f32 %v591, 1.442695
        %v609 = vpow.pop %v608
        %v610 = vmul.f32 %v592, 1.442695
        %v611 = vpow.pop %v610
        %v612 = vmul.f32 %v593, 1.442695
        %v613 = vpow.pop %v612
        %v614 = vmul.f32 %v594, 1.442695
        %v615 = vpow.pop %v614
        %v616 = vmul.f32 %v595, 1.442695
        %v617 = vpow.pop %v616
        %v618 = vmul.f32 %v596, 1.442695
        %v619 = vpow.pop %v618
        %v620 = vmul.f32 %v597, 1.442695
        %v621 = vpow.pop %v620
        %v622 = vmul.f32 %v598, 1.442695
        %v623 = vpow.pop %v622
        %v624 = vmul.f32 %v599, 1.442695
        %v625 = vpow.pop %v624
        %v626 = vmul.f32 %v600, 1.442695
        %v627 = vpow.pop %v626
        %v628 = vmul.f32 %v601, 1.442695
        %v629 = vpow.pop %v628
        %v630 = vmul.f32 %v602, 1.442695
        %v631 = vpow.pop %v630
        %v632 = vmul.f32 %v603, 1.442695
        %v633 = vpow.pop %v632
        %v634 = vmul.f32 %v604, 1.442695
        %v635 = vpow.pop %v634
        %v636 = vmul.f32 %v605, 1.442695
        %v637 = vpow.pop %v636
        %v638 = vadd.f32 %v607, 1.0
        %v639 = vadd.f32 %v609, 1.0
        %v640 = vadd.f32 %v611, 1.0
        %v641 = vadd.f32 %v613, 1.0
        %v642 = vadd.f32 %v615, 1.0
        %v643 = vadd.f32 %v617, 1.0
        %v644 = vadd.f32 %v619, 1.0
        %v645 = vadd.f32 %v621, 1.0
        %v646 = vadd.f32 %v623, 1.0
        %v647 = vadd.f32 %v625, 1.0
        %v648 = vadd.f32 %v627, 1.0
        %v649 = vadd.f32 %v629, 1.0
        %v650 = vadd.f32 %v631, 1.0
        %v651 = vadd.f32 %v633, 1.0
        %v652 = vadd.f32 %v635, 1.0
        %v653 = vadd.f32 %v637, 1.0
        %v654 = vrcp.pop %v638
        %v655 = vmul.f32 1.0, %v654
        %v656 = vrcp.pop %v639
        %v657 = vmul.f32 1.0, %v656
        %v658 = vrcp.pop %v640
        %v659 = vmul.f32 1.0, %v658
        %v660 = vrcp.pop %v641
        %v661 = vmul.f32 1.0, %v660
        %v662 = vrcp.pop %v642
        %v663 = vmul.f32 1.0, %v662
        %v664 = vrcp.pop %v643
        %v665 = vmul.f32 1.0, %v664
        %v666 = vrcp.pop %v644
        %v667 = vmul.f32 1.0, %v666
        %v668 = vrcp.pop %v645
        %v669 = vmul.f32 1.0, %v668
        %v670 = vrcp.pop %v646
        %v671 = vmul.f32 1.0, %v670
        %v672 = vrcp.pop %v647
        %v673 = vmul.f32 1.0, %v672
        %v674 = vrcp.pop %v648
        %v675 = vmul.f32 1.0, %v674
        %v676 = vrcp.pop %v649
        %v677 = vmul.f32 1.0, %v676
        %v678 = vrcp.pop %v650
        %v679 = vmul.f32 1.0, %v678
        %v680 = vrcp.pop %v651
        %v681 = vmul.f32 1.0, %v680
        %v682 = vrcp.pop %v652
        %v683 = vmul.f32 1.0, %v682
        %v684 = vrcp.pop %v653
        %v685 = vmul.f32 1.0, %v684
        %v686 = vpack.c.bf16 %v657, %v655
        %v687 = vpack.c.bf16 %v661, %v659
        %v688 = vpack.c.bf16 %v665, %v663
        %v689 = vpack.c.bf16 %v669, %v667
        %v690 = vpack.c.bf16 %v673, %v671
        %v691 = vpack.c.bf16 %v677, %v675
        %v692 = vpack.c.bf16 %v681, %v679
        %v693 = vpack.c.bf16 %v685, %v683
        %v694 = vld [vmem:[%s3] sm:$0xf]
        %v695 = vld [vmem:[%s3 + $0x4] sm:$0xf]
        %v696 = vld [vmem:[%s3 + $0x8] sm:$0xf]
        %v697 = vld [vmem:[%s3 + $0xc] sm:$0xf]
        %v698 = vld [vmem:[%s3 + $0x10] sm:$0xf]
        %v699 = vld [vmem:[%s3 + $0x14] sm:$0xf]
        %v700 = vld [vmem:[%s3 + $0x18] sm:$0xf]
        %v701 = vld [vmem:[%s3 + $0x1c] sm:$0xf]
        %v702 = vld [vmem:[%s3 + $0x20] sm:$0xf]
        %v703 = vld [vmem:[%s3 + $0x24] sm:$0xf]
        %v704 = vld [vmem:[%s3 + $0x28] sm:$0xf]
        %v705 = vld [vmem:[%s3 + $0x2c] sm:$0xf]
        %v706 = vld [vmem:[%s3 + $0x30] sm:$0xf]
        %v707 = vld [vmem:[%s3 + $0x34] sm:$0xf]
        %v708 = vld [vmem:[%s3 + $0x38] sm:$0xf]
        %v709 = vld [vmem:[%s3 + $0x3c] sm:$0xf]
        %v710 = vld [vmem:[#allocation2] sm:$0x1]
        %v712 = vlaneseq
        %v713 = vshrl.u32 %v712, 7
        %v714 = vsub.s32 0, %v713
        %v715 = vrot.slane %v710, %v714
        %v733 = vunpack.c.l.b16 %v694
        %v734 = vunpack.c.l.b16 %v695
        %v735 = vunpack.c.l.b16 %v696
        %v736 = vunpack.c.l.b16 %v697
        %v737 = vunpack.c.l.b16 %v698
        %v738 = vunpack.c.l.b16 %v699
        %v739 = vunpack.c.l.b16 %v700
        %v740 = vunpack.c.l.b16 %v701
        %v741 = vunpack.c.l.b16 %v702
        %v742 = vunpack.c.l.b16 %v703
        %v743 = vunpack.c.l.b16 %v704
        %v744 = vunpack.c.l.b16 %v705
        %v745 = vunpack.c.l.b16 %v706
        %v746 = vunpack.c.l.b16 %v707
        %v747 = vunpack.c.l.b16 %v708
        %v748 = vunpack.c.l.b16 %v709
        %v749 = vpack.c.b16 %v734, %v733
        %v750 = vpack.c.b16 %v736, %v735
        %v751 = vpack.c.b16 %v738, %v737
        %v752 = vpack.c.b16 %v740, %v739
        %v753 = vpack.c.b16 %v742, %v741
        %v754 = vpack.c.b16 %v744, %v743
        %v755 = vpack.c.b16 %v746, %v745
        %v756 = vpack.c.b16 %v748, %v747
        %765 = vmatprep.subr.bf16.mxu0 0
        %766 = vmatpush1.bf16.msra.mxu0 %v749
        %767 = vmatprep.subr.bf16.mxu0 0
        %768 = vmatpush1.bf16.msra.mxu0 %v750
        %769 = vmatprep.subr.bf16.mxu0 0
        %770 = vmatpush1.bf16.msra.mxu0 %v751
        %771 = vmatprep.subr.bf16.mxu0 0
        %772 = vmatpush1.bf16.msra.mxu0 %v752
        %773 = vmatprep.subr.bf16.mxu0 0
        %774 = vmatpush1.bf16.msra.mxu0 %v753
        %775 = vmatprep.subr.bf16.mxu0 0
        %776 = vmatpush1.bf16.msra.mxu0 %v754
        %777 = vmatprep.subr.bf16.mxu0 0
        %778 = vmatpush1.bf16.msra.mxu0 %v755
        %779 = vmatprep.subr.bf16.mxu0 0
        %780 = vmatpush1.bf16.msra.mxu0 %v756
        %781 = vmatprep.subr.bf16.mxu0 0
        %782 = vmatpush1.bf16.msra.mxu0 0
        %783 = vmatprep.subr.bf16.mxu0 0
        %784 = vmatpush1.bf16.msra.mxu0 0
        %785 = vmatprep.subr.bf16.mxu0 0
        %786 = vmatpush1.bf16.msra.mxu0 0
        %787 = vmatprep.subr.bf16.mxu0 0
        %788 = vmatpush1.bf16.msra.mxu0 0
        %789 = vmatprep.subr.bf16.mxu0 0
        %790 = vmatpush1.bf16.msra.mxu0 0
        %791 = vmatprep.subr.bf16.mxu0 0
        %792 = vmatpush1.bf16.msra.mxu0 0
        %793 = vmatprep.subr.bf16.mxu0 0
        %794 = vmatpush1.bf16.msra.mxu0 0
        %795 = vmatprep.subr.bf16.mxu0 0
        %796 = vmatpush1.bf16.msra.mxu0 0
        %797 = vmatprep.mubr.bf16.mxu0 0
        %798 = vmatmul.mubr.bf16.gmra.mrb[0].mxu0 %v686
        %v799 = vpop.f32.mrb[0].mxu0
        %v800 = vadd.f32 %v715, %v799
        %v801 = vpop.f32.mrb[0].mxu0
        %v802 = vpop.f32.mrb[0].mxu0
        %v803 = vadd.f32 %v715, %v802
        %v804 = vpop.f32.mrb[0].mxu0
        %805 = vmatprep.mubr.bf16.mxu0 0
        %806 = vmatmul.mubr.bf16.gmra.mrb[0].mxu0 %v687
        %v807 = vpop.f32.mrb[0].mxu0
        %v808 = vadd.f32 %v715, %v807
        %v809 = vpop.f32.mrb[0].mxu0
        %v810 = vpop.f32.mrb[0].mxu0
        %v811 = vadd.f32 %v715, %v810
        %v812 = vpop.f32.mrb[0].mxu0
        %813 = vmatprep.mubr.bf16.mxu0 0
        %814 = vmatmul.mubr.bf16.gmra.mrb[0].mxu0 %v688
        %v815 = vpop.f32.mrb[0].mxu0
        %v816 = vadd.f32 %v715, %v815
        %v817 = vpop.f32.mrb[0].mxu0
        %v818 = vpop.f32.mrb[0].mxu0
        %v819 = vadd.f32 %v715, %v818
        %v820 = vpop.f32.mrb[0].mxu0
        %821 = vmatprep.mubr.bf16.mxu0 0
        %822 = vmatmul.mubr.bf16.gmra.mrb[0].mxu0 %v689
        %v823 = vpop.f32.mrb[0].mxu0
        %v824 = vadd.f32 %v715, %v823
        %v825 = vpop.f32.mrb[0].mxu0
        %v826 = vpop.f32.mrb[0].mxu0
        %v827 = vadd.f32 %v715, %v826
        %v828 = vpop.f32.mrb[0].mxu0
        %829 = vmatprep.mubr.bf16.mxu0 0
        %830 = vmatmul.mubr.bf16.gmra.mrb[0].mxu0 %v690
        %v831 = vpop.f32.mrb[0].mxu0
        %v832 = vadd.f32 %v715, %v831
        %v833 = vpop.f32.mrb[0].mxu0
        %v834 = vpop.f32.mrb[0].mxu0
        %v835 = vadd.f32 %v715, %v834
        %v836 = vpop.f32.mrb[0].mxu0
        %837 = vmatprep.mubr.bf16.mxu0 0
        %838 = vmatmul.mubr.bf16.gmra.mrb[0].mxu0 %v691
        %v839 = vpop.f32.mrb[0].mxu0
        %v840 = vadd.f32 %v715, %v839
        %v841 = vpop.f32.mrb[0].mxu0
        %v842 = vpop.f32.mrb[0].mxu0
        %v843 = vadd.f32 %v715, %v842
        %v844 = vpop.f32.mrb[0].mxu0
        %845 = vmatprep.mubr.bf16.mxu0 0
        %846 = vmatmul.mubr.bf16.gmra.mrb[0].mxu0 %v692
        %v847 = vpop.f32.mrb[0].mxu0
        %v848 = vadd.f32 %v715, %v847
        %v849 = vpop.f32.mrb[0].mxu0
        %v850 = vpop.f32.mrb[0].mxu0
        %v851 = vadd.f32 %v715, %v850
        %v852 = vpop.f32.mrb[0].mxu0
        %853 = vmatprep.mubr.bf16.mxu0 0
        %854 = vmatmul.mubr.bf16.gmra.mrb[0].mxu0 %v693
        %v855 = vpop.f32.mrb[0].mxu0
        %v856 = vadd.f32 %v715, %v855
        %v857 = vpop.f32.mrb[0].mxu0
        %v858 = vpop.f32.mrb[0].mxu0
        %v859 = vadd.f32 %v715, %v858
        %v860 = vpop.f32.mrb[0].mxu0
        %861 = vdwg.mxu0
        %v862 = vxor.u32 %v800, 2147483648
        %v863 = vxor.u32 %v803, 2147483648
        %v864 = vxor.u32 %v808, 2147483648
        %v865 = vxor.u32 %v811, 2147483648
        %v866 = vxor.u32 %v816, 2147483648
        %v867 = vxor.u32 %v819, 2147483648
        %v868 = vxor.u32 %v824, 2147483648
        %v869 = vxor.u32 %v827, 2147483648
        %v870 = vxor.u32 %v832, 2147483648
        %v871 = vxor.u32 %v835, 2147483648
        %v872 = vxor.u32 %v840, 2147483648
        %v873 = vxor.u32 %v843, 2147483648
        %v874 = vxor.u32 %v848, 2147483648
        %v875 = vxor.u32 %v851, 2147483648
        %v876 = vxor.u32 %v856, 2147483648
        %v877 = vxor.u32 %v859, 2147483648
        %v878 = vmul.f32 %v862, 1.442695
        %v879 = vpow.pop %v878
        %v880 = vmul.f32 %v863, 1.442695
        %v881 = vpow.pop %v880
        %v882 = vmul.f32 %v864, 1.442695
        %v883 = vpow.pop %v882
        %v884 = vmul.f32 %v865, 1.442695
        %v885 = vpow.pop %v884
        %v886 = vmul.f32 %v866, 1.442695
        %v887 = vpow.pop %v886
        %v888 = vmul.f32 %v867, 1.442695
        %v889 = vpow.pop %v888
        %v890 = vmul.f32 %v868, 1.442695
        %v891 = vpow.pop %v890
        %v892 = vmul.f32 %v869, 1.442695
        %v893 = vpow.pop %v892
        %v894 = vmul.f32 %v870, 1.442695
        %v895 = vpow.pop %v894
        %v896 = vmul.f32 %v871, 1.442695
        %v897 = vpow.pop %v896
        %v898 = vmul.f32 %v872, 1.442695
        %v899 = vpow.pop %v898
        %v900 = vmul.f32 %v873, 1.442695
        %v901 = vpow.pop %v900
        %v902 = vmul.f32 %v874, 1.442695
        %v903 = vpow.pop %v902
        %v904 = vmul.f32 %v875, 1.442695
        %v905 = vpow.pop %v904
        %v906 = vmul.f32 %v876, 1.442695
        %v907 = vpow.pop %v906
        %v908 = vmul.f32 %v877, 1.442695
        %v909 = vpow.pop %v908
        %v910 = vadd.f32 %v879, 1.0
        %v911 = vadd.f32 %v881, 1.0
        %v912 = vadd.f32 %v883, 1.0
        %v913 = vadd.f32 %v885, 1.0
        %v914 = vadd.f32 %v887, 1.0
        %v915 = vadd.f32 %v889, 1.0
        %v916 = vadd.f32 %v891, 1.0
        %v917 = vadd.f32 %v893, 1.0
        %v918 = vadd.f32 %v895, 1.0
        %v919 = vadd.f32 %v897, 1.0
        %v920 = vadd.f32 %v899, 1.0
        %v921 = vadd.f32 %v901, 1.0
        %v922 = vadd.f32 %v903, 1.0
        %v923 = vadd.f32 %v905, 1.0
        %v924 = vadd.f32 %v907, 1.0
        %v925 = vadd.f32 %v909, 1.0
        %v926 = vrcp.pop %v910
        %v927 = vmul.f32 1.0, %v926
        %v928 = vrcp.pop %v911
        %v929 = vmul.f32 1.0, %v928
        %v930 = vrcp.pop %v912
        %v931 = vmul.f32 1.0, %v930
        %v932 = vrcp.pop %v913
        %v933 = vmul.f32 1.0, %v932
        %v934 = vrcp.pop %v914
        %v935 = vmul.f32 1.0, %v934
        %v936 = vrcp.pop %v915
        %v937 = vmul.f32 1.0, %v936
        %v938 = vrcp.pop %v916
        %v939 = vmul.f32 1.0, %v938
        %v940 = vrcp.pop %v917
        %v941 = vmul.f32 1.0, %v940
        %v942 = vrcp.pop %v918
        %v943 = vmul.f32 1.0, %v942
        %v944 = vrcp.pop %v919
        %v945 = vmul.f32 1.0, %v944
        %v946 = vrcp.pop %v920
        %v947 = vmul.f32 1.0, %v946
        %v948 = vrcp.pop %v921
        %v949 = vmul.f32 1.0, %v948
        %v950 = vrcp.pop %v922
        %v951 = vmul.f32 1.0, %v950
        %v952 = vrcp.pop %v923
        %v953 = vmul.f32 1.0, %v952
        %v954 = vrcp.pop %v924
        %v955 = vmul.f32 1.0, %v954
        %v956 = vrcp.pop %v925
        %v957 = vmul.f32 1.0, %v956
        %958 = vxpose.xlu0.b32.start [1/16] %v927, 128
        %959 = vxpose.xlu0.b32.cont [2/16] %v929, 128
        %960 = vxpose.xlu0.b32.cont [3/16] %v931, 128
        %961 = vxpose.xlu0.b32.cont [4/16] %v933, 128
        %962 = vxpose.xlu0.b32.cont [5/16] %v935, 128
        %963 = vxpose.xlu0.b32.cont [6/16] %v937, 128
        %964 = vxpose.xlu0.b32.cont [7/16] %v939, 128
        %965 = vxpose.xlu0.b32.cont [8/16] %v941, 128
        %966 = vxpose.xlu0.b32.cont [9/16] %v943, 128
        %967 = vxpose.xlu0.b32.cont [10/16] %v945, 128
        %968 = vxpose.xlu0.b32.cont [11/16] %v947, 128
        %969 = vxpose.xlu0.b32.cont [12/16] %v949, 128
        %970 = vxpose.xlu0.b32.cont [13/16] %v951, 128
        %971 = vxpose.xlu0.b32.cont [14/16] %v953, 128
        %972 = vxpose.xlu0.b32.cont [15/16] %v955, 128
        %973 = vxpose.xlu0.b32.end [16/16] %v957, 128
        %v974 = vpop.trf.xlu0
        %v975 = vpop.trf.xlu0
        %v976 = vpop.trf.xlu0
        %v977 = vpop.trf.xlu0
        %v978 = vpop.trf.xlu0
        %v979 = vpop.trf.xlu0
        %v980 = vpop.trf.xlu0
        %v981 = vpop.trf.xlu0
        %v982 = vpop.trf.xlu0
        %v983 = vpop.trf.xlu0
        %v984 = vpop.trf.xlu0
        %v985 = vpop.trf.xlu0
        %v986 = vpop.trf.xlu0
        %v987 = vpop.trf.xlu0
        %v988 = vpop.trf.xlu0
        %v989 = vpop.trf.xlu0
        %990 = vst [vmem:[%s259] sm:$0x1] %v974
        %s991 = sand.u32 %s143, 1
        %s992 = scalar_lea.sflag [#allocation5], %s991
        %s993 = sand.u32 %s143, 1
        %s994 = scalar_lea.vmem [#allocation8], %s993
        // Predicated region
        $region49: #{tpu_custom_call.1} parent=39 // pred_check
          %p995 = pneg %p153
        $region50: #{tpu_custom_call.1} parent=39 // pred_check_branch
          %997 = sbr.rel (%p995) target = $region52
        $region51: #{tpu_custom_call.1} parent=39 // pred_region
          %s999 = ssub.s32 16, 16
          %1000 = vsyncadd %s992, %s999
          %s1001 = smul.addr %s25, 16
          %s1002 = scalar_lea.hbm %s5, %s1001
          %s1004 = sshll.u32 %s994, 4
          %s1005 = int_to_ptr.vmem [resolvable:$true] %s1004
          %1007 = dma.vmem_to_hbm [thread:$0]  %s1005, 16, %s1002, %s992
        $region52: #{tpu_custom_call.1} parent=39 // pred_fallthru
          _
      $region40: #{tpu_custom_call.1} parent=5 // pred_fallthru
        _
      %p1008 = scmp.le.s32.totalorder 2, %s20
      // Predicated region
      $region53: #{tpu_custom_call.1} parent=5 // pred_check
        %p1009 = pneg %p1008
      $region54: #{tpu_custom_call.1} parent=5 // pred_check_branch
        %1011 = sbr.rel (%p1009) target = $region56
      $region55: #{tpu_custom_call.1} parent=5 // pred_region
        %s1012 = ssub.s32 %s20, 2
        // Predicated region
        $region57: #{tpu_custom_call.1} parent=55 // pred_check
          %p1013 = pneg %p159
        $region58: #{tpu_custom_call.1} parent=55 // pred_check_branch
          %1015 = sbr.rel (%p1013) target = $region60
        $region59: #{tpu_custom_call.1} parent=55 // pred_region
          %s1016 = sand.u32 %s144, 1
          %s1017 = scalar_lea.sflag [#allocation5], %s1016
          %s1018 = sand.u32 %s144, 1
          %s1019 = scalar_lea.vmem [#allocation8], %s1018
          %1020 = dma.done %s1017, 16
        $region60: #{tpu_custom_call.1} parent=55 // pred_fallthru
          _
      $region56: #{tpu_custom_call.1} parent=5 // pred_fallthru
        _
    $region6: #{tpu_custom_call.1} parent=1 // loop_footer
      %s24 = sadd.s32 1, %s20
    $region7: #{tpu_custom_call.1} parent=1 // loop_footer_branch
      %19 = sbr.rel target = $region3
    $region8: #{tpu_custom_call.1} parent=1 // loop_exit
      _
    %1021 = vsyncpa [#allocation4], 1
    %s1022 = scalar_lea.sflag [#allocation4], 1
    %1023 = vsyncpa %s1022, 1
    %1024 = vsyncpa [#allocation7], 1
    %1025 = vsyncpa [#allocation5], 1
    %s1026 = scalar_lea.sflag [#allocation5], 1
    %1027 = vsyncpa %s1026, 1

</llo_original>
